<compile_context>
chip_gen: v7x
topology: tpu7x:2x2x1
jax: 0.10.0
libtpu: 0.0.40
codegen_flags: <defaults>
</compile_context>

<pallas_src>
import functools

import jax
import jax.numpy as jnp
from jax import lax
from jax.experimental import pallas as pl
from jax.experimental.pallas import tpu as pltpu


def _round_up(n, m):
    return ((n + m - 1) // m) * m


def _make_rnn_kernel(seq_length, b_pad, h_pad):
    """Builds the single-invocation RNN kernel for static (S, Bp, Hp)."""

    def kernel(x_ref, whxT_ref, whhT_ref, bh_ref, wphT_ref, bp_ref,
               out_ref, p_ref):
        # ---- Pass 1: input projection for ALL time steps as one GEMM ------
        # x_ref:    (S*Bp, D)     time-major rows, batch within each block
        # whxT_ref: (D, Hp)
        # p_ref:    (S*Bp, Hp)    scratch; rows [t*Bp, (t+1)*Bp) hold P_t
        p_ref[...] = (
            jnp.dot(x_ref[...], whxT_ref[...],
                    preferred_element_type=jnp.float32)
            + bh_ref[...]                       # (1, Hp) bias, broadcast once
        )

        whhT = whhT_ref[...]                    # (Hp, Hp), hoisted out of loop

        # ---- Pass 2: serial recurrence, entirely resident in VMEM ---------
        def step(t, h):                         # h: (Bp, Hp), lane-dense
            row = pl.multiple_of(t * b_pad, b_pad)
            p_t = p_ref[pl.ds(row, b_pad), :]
            return jnp.tanh(
                jnp.dot(h, whhT, preferred_element_type=jnp.float32) + p_t)

        h0 = jnp.zeros((b_pad, h_pad), jnp.float32)
        h = lax.fori_loop(0, seq_length, step, h0, unroll=True)

        # ---- Epilogue: classifier projection (lane-dense (Bp, Cp) store) --
        out_ref[...] = (
            jnp.dot(h, wphT_ref[...], preferred_element_type=jnp.float32)
            + bp_ref[...]
        ).astype(out_ref.dtype)

    return kernel


@functools.partial(jax.jit, static_argnames=("seq_length",))
def vanilla_rnn_forward(x, w_hx, w_hh, b_h, w_ph, b_p, *, seq_length):
    """x: (B, S, D) float32.  Returns (B, C) float32."""
    B, S, D = x.shape
    H = w_hx.shape[0]
    C = w_ph.shape[0]
    assert S == seq_length
    # PyTorch's `x[:, i].view(-1, 1).t()` only matches a (D, B) slab for D==1.
    assert D == 1, "VanillaRNN forward semantics only well-defined for input_dim == 1"

    Bp = _round_up(B, 8)        # sublane multiple
    Hp = _round_up(H, 128)      # lane multiple (hidden lives in lanes)
    Cp = _round_up(C, 128)      # lane multiple (classes live in lanes)

    f32 = jnp.float32

    # ---- glue: time-major, batch-rows, lane-dense layouts (plain JAX) -----
    x_tm = jnp.transpose(x.astype(f32), (1, 0, 2))            # (S, B, D)
    x_tm = jnp.pad(x_tm, ((0, 0), (0, Bp - B), (0, 0)))       # (S, Bp, D)
    x_flat = x_tm.reshape(S * Bp, D)                          # (S*Bp, D)

    whxT = jnp.pad(w_hx.T.astype(f32), ((0, 0), (0, Hp - H)))             # (D, Hp)
    whhT = jnp.pad(w_hh.T.astype(f32), ((0, Hp - H), (0, Hp - H)))        # (Hp, Hp)
    bh_row = jnp.pad(b_h.T.astype(f32), ((0, 0), (0, Hp - H)))            # (1, Hp)
    wphT = jnp.pad(w_ph.T.astype(f32), ((0, Hp - H), (0, Cp - C)))        # (Hp, Cp)
    bp_row = jnp.pad(b_p.T.astype(f32), ((0, 0), (0, Cp - C)))            # (1, Cp)

    kernel = _make_rnn_kernel(S, Bp, Hp)

    out_padded = pl.pallas_call(
        kernel,
        out_shape=jax.ShapeDtypeStruct((Bp, Cp), f32),
        grid=(1,),
        in_specs=[
            pl.BlockSpec((S * Bp, D), lambda i: (0, 0)),   # x (time-major rows)
            pl.BlockSpec((D, Hp), lambda i: (0, 0)),       # W_hx^T
            pl.BlockSpec((Hp, Hp), lambda i: (0, 0)),      # W_hh^T
            pl.BlockSpec((1, Hp), lambda i: (0, 0)),       # b_h (row)
            pl.BlockSpec((Hp, Cp), lambda i: (0, 0)),      # W_ph^T
            pl.BlockSpec((1, Cp), lambda i: (0, 0)),       # b_p (row)
        ],
        out_specs=pl.BlockSpec((Bp, Cp), lambda i: (0, 0)),
        scratch_shapes=[pltpu.VMEM((S * Bp, Hp), f32)],    # precomputed P
        compiler_params=pltpu.CompilerParams(
            dimension_semantics=("arbitrary",),
        ),
    )(x_flat, whxT, whhT, bh_row, wphT, bp_row)

    return out_padded[:B, :C]                              # (B, C)


def _kaiming_uniform(key, shape):
    # torch.nn.init.kaiming_uniform_ default (a=sqrt(5)) => bound = 1/sqrt(fan_in)
    fan_in = shape[1]
    bound = 1.0 / jnp.sqrt(jnp.float32(fan_in))
    return jax.random.uniform(key, shape, jnp.float32, minval=-bound, maxval=bound)


def _reference_forward(x, w_hx, w_hh, b_h, w_ph, b_p):
    """Pure-JAX reference mirroring the PyTorch loop (sanity check)."""
    B, S, D = x.shape
    H = w_hx.shape[0]
    h = jnp.zeros((H, B), jnp.float32)
    for i in range(S):
        x_t = x[:, i].reshape(-1, 1).T            # (1, B*D) == (D, B) for D=1
        h = jnp.tanh(w_hx @ x_t + w_hh @ h + b_h)
    out = w_ph @ h + b_p
    return out.T


if __name__ == "__main__":
    # Small shapes consistent with the module (palindrome-style task).
    batch, seq_length, input_dim, num_hidden, num_classes = 8, 8, 1, 32, 10

    key = jax.random.PRNGKey(0)
    k_x, k_whx, k_whh, k_bh, k_wph, k_bp = jax.random.split(key, 6)

    x = jax.random.normal(k_x, (batch, seq_length, input_dim), jnp.float32)
    w_hx = _kaiming_uniform(k_whx, (num_hidden, input_dim))
    w_hh = _kaiming_uniform(k_whh, (num_hidden, num_hidden))
    b_h = _kaiming_uniform(k_bh, (num_hidden, 1))
    w_ph = _kaiming_uniform(k_wph, (num_classes, num_hidden))
    b_p = _kaiming_uniform(k_bp, (num_classes, 1))

    out = vanilla_rnn_forward(x, w_hx, w_hh, b_h, w_ph, b_p,
                              seq_length=seq_length)
    out = jax.block_until_ready(out)

    ref = _reference_forward(x, w_hx, w_hh, b_h, w_ph, b_p)
    assert out.shape == (batch, num_classes)
    assert jnp.allclose(out, ref, atol=1e-4, rtol=1e-4), (
        float(jnp.max(jnp.abs(out - ref))))

    print("KERNEL_OK")
</pallas_src>

<mosaic_0001>
module attributes {stable_mosaic.version = 11 : i64} {
  func.func @kernel(%arg0: i32, %arg1: memref<64x1xf32, #tpu.memory_space<vmem>>, %arg2: memref<1x128xf32, #tpu.memory_space<vmem>>, %arg3: memref<128x128xf32, #tpu.memory_space<vmem>>, %arg4: memref<1x128xf32, #tpu.memory_space<vmem>>, %arg5: memref<128x128xf32, #tpu.memory_space<vmem>>, %arg6: memref<1x128xf32, #tpu.memory_space<vmem>>, %arg7: memref<8x128xf32, #tpu.memory_space<vmem>>, %arg8: memref<64x128xf32, #tpu.memory_space<vmem>>) attributes {dimension_semantics = [#tpu.dimension_semantics<arbitrary>], iteration_bounds = array<i64: 1>, scalar_prefetch = 0 : i64, scratch_operands = 1 : i64, tpu.core_type = #tpu.core_type<tc>, window_params = [{pipeline_mode = #tpu.pipeline_mode<synchronous>, transform_indices = @transform_0, window_bounds = array<i64: 64, 1>}, {pipeline_mode = #tpu.pipeline_mode<synchronous>, transform_indices = @transform_1, window_bounds = array<i64: 1, 128>}, {pipeline_mode = #tpu.pipeline_mode<synchronous>, transform_indices = @transform_2, window_bounds = array<i64: 128, 128>}, {pipeline_mode = #tpu.pipeline_mode<synchronous>, transform_indices = @transform_3, window_bounds = array<i64: 1, 128>}, {pipeline_mode = #tpu.pipeline_mode<synchronous>, transform_indices = @transform_4, window_bounds = array<i64: 128, 128>}, {pipeline_mode = #tpu.pipeline_mode<synchronous>, transform_indices = @transform_5, window_bounds = array<i64: 1, 128>}, {pipeline_mode = #tpu.pipeline_mode<synchronous>, transform_indices = @transform_6, window_bounds = array<i64: 8, 128>}]} {
    %c0 = arith.constant 0 : index
    %c0_0 = arith.constant 0 : index
    %0 = vector.load %arg1[%c0, %c0_0] : memref<64x1xf32, #tpu.memory_space<vmem>>, vector<64x1xf32>
    %c0_1 = arith.constant 0 : index
    %c0_2 = arith.constant 0 : index
    %1 = vector.load %arg2[%c0_1, %c0_2] : memref<1x128xf32, #tpu.memory_space<vmem>>, vector<1x128xf32>
    %cst = arith.constant dense<0.000000e+00> : vector<64x128xf32>
    %2 = tpu.matmul %0, %1, %cst {dimension_numbers = #tpu.dot_dimension_numbers<[1], [0], [0], [1], [0, 0, 1, 1], [], []>} : vector<64x1xf32>, vector<1x128xf32>, vector<64x128xf32> -> vector<64x128xf32>
    %c0_3 = arith.constant 0 : index
    %c0_4 = arith.constant 0 : index
    %3 = vector.load %arg4[%c0_3, %c0_4] : memref<1x128xf32, #tpu.memory_space<vmem>>, vector<1x128xf32>
    %4 = vector.broadcast %3 : vector<1x128xf32> to vector<64x128xf32>
    %5 = arith.addf %2, %4 : vector<64x128xf32>
    %c0_5 = arith.constant 0 : index
    %c0_6 = arith.constant 0 : index
    %6 = vector.load %arg8[%c0_5, %c0_6] : memref<64x128xf32, #tpu.memory_space<vmem>>, vector<64x128xf32>
    tpu.vector_store %arg8[%c0_5, %c0_6], %5 {strides = array<i32>} : memref<64x128xf32, #tpu.memory_space<vmem>>, vector<64x128xf32>,
    %c0_7 = arith.constant 0 : index
    %c0_8 = arith.constant 0 : index
    %7 = vector.load %arg3[%c0_7, %c0_8] : memref<128x128xf32, #tpu.memory_space<vmem>>, vector<128x128xf32>
    %cst_9 = arith.constant 0.000000e+00 : f32
    %8 = vector.broadcast %cst_9 : f32 to vector<8x128xf32>
    %c0_i32 = arith.constant 0 : i32
    %c8_i32 = arith.constant 8 : i32
    %9 = arith.muli %c0_i32, %c8_i32 : i32
    %10 = tpu.assume_multiple %9, 8 : i32
    %11 = arith.index_cast %10 : i32 to index
    %c0_10 = arith.constant 0 : index
    %12 = vector.load %arg8[%11, %c0_10] : memref<64x128xf32, #tpu.memory_space<vmem>>, vector<8x128xf32>
    %cst_11 = arith.constant dense<0.000000e+00> : vector<8x128xf32>
    %13 = tpu.matmul %8, %7, %cst_11 {dimension_numbers = #tpu.dot_dimension_numbers<[1], [0], [0], [1], [0, 0, 1, 1], [], []>} : vector<8x128xf32>, vector<128x128xf32>, vector<8x128xf32> -> vector<8x128xf32>
    %14 = arith.addf %13, %12 : vector<8x128xf32>
    %15 = math.tanh %14 : vector<8x128xf32>
    %c1_i32 = arith.constant 1 : i32
    %c8_i32_12 = arith.constant 8 : i32
    %16 = arith.muli %c1_i32, %c8_i32_12 : i32
    %17 = tpu.assume_multiple %16, 8 : i32
    %18 = arith.index_cast %17 : i32 to index
    %c0_13 = arith.constant 0 : index
    %19 = vector.load %arg8[%18, %c0_13] : memref<64x128xf32, #tpu.memory_space<vmem>>, vector<8x128xf32>
    %cst_14 = arith.constant dense<0.000000e+00> : vector<8x128xf32>
    %20 = tpu.matmul %15, %7, %cst_14 {dimension_numbers = #tpu.dot_dimension_numbers<[1], [0], [0], [1], [0, 0, 1, 1], [], []>} : vector<8x128xf32>, vector<128x128xf32>, vector<8x128xf32> -> vector<8x128xf32>
    %21 = arith.addf %20, %19 : vector<8x128xf32>
    %22 = math.tanh %21 : vector<8x128xf32>
    %c2_i32 = arith.constant 2 : i32
    %c8_i32_15 = arith.constant 8 : i32
    %23 = arith.muli %c2_i32, %c8_i32_15 : i32
    %24 = tpu.assume_multiple %23, 8 : i32
    %25 = arith.index_cast %24 : i32 to index
    %c0_16 = arith.constant 0 : index
    %26 = vector.load %arg8[%25, %c0_16] : memref<64x128xf32, #tpu.memory_space<vmem>>, vector<8x128xf32>
    %cst_17 = arith.constant dense<0.000000e+00> : vector<8x128xf32>
    %27 = tpu.matmul %22, %7, %cst_17 {dimension_numbers = #tpu.dot_dimension_numbers<[1], [0], [0], [1], [0, 0, 1, 1], [], []>} : vector<8x128xf32>, vector<128x128xf32>, vector<8x128xf32> -> vector<8x128xf32>
    %28 = arith.addf %27, %26 : vector<8x128xf32>
    %29 = math.tanh %28 : vector<8x128xf32>
    %c3_i32 = arith.constant 3 : i32
    %c8_i32_18 = arith.constant 8 : i32
    %30 = arith.muli %c3_i32, %c8_i32_18 : i32
    %31 = tpu.assume_multiple %30, 8 : i32
    %32 = arith.index_cast %31 : i32 to index
    %c0_19 = arith.constant 0 : index
    %33 = vector.load %arg8[%32, %c0_19] : memref<64x128xf32, #tpu.memory_space<vmem>>, vector<8x128xf32>
    %cst_20 = arith.constant dense<0.000000e+00> : vector<8x128xf32>
    %34 = tpu.matmul %29, %7, %cst_20 {dimension_numbers = #tpu.dot_dimension_numbers<[1], [0], [0], [1], [0, 0, 1, 1], [], []>} : vector<8x128xf32>, vector<128x128xf32>, vector<8x128xf32> -> vector<8x128xf32>
    %35 = arith.addf %34, %33 : vector<8x128xf32>
    %36 = math.tanh %35 : vector<8x128xf32>
    %c4_i32 = arith.constant 4 : i32
    %c8_i32_21 = arith.constant 8 : i32
    %37 = arith.muli %c4_i32, %c8_i32_21 : i32
    %38 = tpu.assume_multiple %37, 8 : i32
    %39 = arith.index_cast %38 : i32 to index
    %c0_22 = arith.constant 0 : index
    %40 = vector.load %arg8[%39, %c0_22] : memref<64x128xf32, #tpu.memory_space<vmem>>, vector<8x128xf32>
    %cst_23 = arith.constant dense<0.000000e+00> : vector<8x128xf32>
    %41 = tpu.matmul %36, %7, %cst_23 {dimension_numbers = #tpu.dot_dimension_numbers<[1], [0], [0], [1], [0, 0, 1, 1], [], []>} : vector<8x128xf32>, vector<128x128xf32>, vector<8x128xf32> -> vector<8x128xf32>
    %42 = arith.addf %41, %40 : vector<8x128xf32>
    %43 = math.tanh %42 : vector<8x128xf32>
    %c5_i32 = arith.constant 5 : i32
    %c8_i32_24 = arith.constant 8 : i32
    %44 = arith.muli %c5_i32, %c8_i32_24 : i32
    %45 = tpu.assume_multiple %44, 8 : i32
    %46 = arith.index_cast %45 : i32 to index
    %c0_25 = arith.constant 0 : index
    %47 = vector.load %arg8[%46, %c0_25] : memref<64x128xf32, #tpu.memory_space<vmem>>, vector<8x128xf32>
    %cst_26 = arith.constant dense<0.000000e+00> : vector<8x128xf32>
    %48 = tpu.matmul %43, %7, %cst_26 {dimension_numbers = #tpu.dot_dimension_numbers<[1], [0], [0], [1], [0, 0, 1, 1], [], []>} : vector<8x128xf32>, vector<128x128xf32>, vector<8x128xf32> -> vector<8x128xf32>
    %49 = arith.addf %48, %47 : vector<8x128xf32>
    %50 = math.tanh %49 : vector<8x128xf32>
    %c6_i32 = arith.constant 6 : i32
    %c8_i32_27 = arith.constant 8 : i32
    %51 = arith.muli %c6_i32, %c8_i32_27 : i32
    %52 = tpu.assume_multiple %51, 8 : i32
    %53 = arith.index_cast %52 : i32 to index
    %c0_28 = arith.constant 0 : index
    %54 = vector.load %arg8[%53, %c0_28] : memref<64x128xf32, #tpu.memory_space<vmem>>, vector<8x128xf32>
    %cst_29 = arith.constant dense<0.000000e+00> : vector<8x128xf32>
    %55 = tpu.matmul %50, %7, %cst_29 {dimension_numbers = #tpu.dot_dimension_numbers<[1], [0], [0], [1], [0, 0, 1, 1], [], []>} : vector<8x128xf32>, vector<128x128xf32>, vector<8x128xf32> -> vector<8x128xf32>
    %56 = arith.addf %55, %54 : vector<8x128xf32>
    %57 = math.tanh %56 : vector<8x128xf32>
    %c7_i32 = arith.constant 7 : i32
    %c8_i32_30 = arith.constant 8 : i32
    %58 = arith.muli %c7_i32, %c8_i32_30 : i32
    %59 = tpu.assume_multiple %58, 8 : i32
    %60 = arith.index_cast %59 : i32 to index
    %c0_31 = arith.constant 0 : index
    %61 = vector.load %arg8[%60, %c0_31] : memref<64x128xf32, #tpu.memory_space<vmem>>, vector<8x128xf32>
    %cst_32 = arith.constant dense<0.000000e+00> : vector<8x128xf32>
    %62 = tpu.matmul %57, %7, %cst_32 {dimension_numbers = #tpu.dot_dimension_numbers<[1], [0], [0], [1], [0, 0, 1, 1], [], []>} : vector<8x128xf32>, vector<128x128xf32>, vector<8x128xf32> -> vector<8x128xf32>
    %63 = arith.addf %62, %61 : vector<8x128xf32>
    %64 = math.tanh %63 : vector<8x128xf32>
    %c8_i32_33 = arith.constant 8 : i32
    %c0_34 = arith.constant 0 : index
    %c0_35 = arith.constant 0 : index
    %65 = vector.load %arg5[%c0_34, %c0_35] : memref<128x128xf32, #tpu.memory_space<vmem>>, vector<128x128xf32>
    %cst_36 = arith.constant dense<0.000000e+00> : vector<8x128xf32>
    %66 = tpu.matmul %64, %65, %cst_36 {dimension_numbers = #tpu.dot_dimension_numbers<[1], [0], [0], [1], [0, 0, 1, 1], [], []>} : vector<8x128xf32>, vector<128x128xf32>, vector<8x128xf32> -> vector<8x128xf32>
    %c0_37 = arith.constant 0 : index
    %c0_38 = arith.constant 0 : index
    %67 = vector.load %arg6[%c0_37, %c0_38] : memref<1x128xf32, #tpu.memory_space<vmem>>, vector<1x128xf32>
    %68 = vector.broadcast %67 : vector<1x128xf32> to vector<8x128xf32>
    %69 = arith.addf %66, %68 : vector<8x128xf32>
    %c0_39 = arith.constant 0 : index
    %c0_40 = arith.constant 0 : index
    %70 = vector.load %arg7[%c0_39, %c0_40] : memref<8x128xf32, #tpu.memory_space<vmem>>, vector<8x128xf32>
    tpu.vector_store %arg7[%c0_39, %c0_40], %69 {strides = array<i32>} : memref<8x128xf32, #tpu.memory_space<vmem>>, vector<8x128xf32>,
    return
  }
  func.func @transform_0(%arg0: i32) -> (i32, i32) {
    %c0_i32 = arith.constant 0 : i32
    %c0_i32_0 = arith.constant 0 : i32
    %c0_i32_1 = arith.constant 0 : i32
    return %c0_i32, %c0_i32_0 : i32, i32
  }
  func.func @transform_1(%arg0: i32) -> (i32, i32) {
    %c0_i32 = arith.constant 0 : i32
    %c0_i32_0 = arith.constant 0 : i32
    %c0_i32_1 = arith.constant 0 : i32
    return %c0_i32, %c0_i32_0 : i32, i32
  }
  func.func @transform_2(%arg0: i32) -> (i32, i32) {
    %c0_i32 = arith.constant 0 : i32
    %c0_i32_0 = arith.constant 0 : i32
    %c0_i32_1 = arith.constant 0 : i32
    return %c0_i32, %c0_i32_0 : i32, i32
  }
  func.func @transform_3(%arg0: i32) -> (i32, i32) {
    %c0_i32 = arith.constant 0 : i32
    %c0_i32_0 = arith.constant 0 : i32
    %c0_i32_1 = arith.constant 0 : i32
    return %c0_i32, %c0_i32_0 : i32, i32
  }
  func.func @transform_4(%arg0: i32) -> (i32, i32) {
    %c0_i32 = arith.constant 0 : i32
    %c0_i32_0 = arith.constant 0 : i32
    %c0_i32_1 = arith.constant 0 : i32
    return %c0_i32, %c0_i32_0 : i32, i32
  }
  func.func @transform_5(%arg0: i32) -> (i32, i32) {
    %c0_i32 = arith.constant 0 : i32
    %c0_i32_0 = arith.constant 0 : i32
    %c0_i32_1 = arith.constant 0 : i32
    return %c0_i32, %c0_i32_0 : i32, i32
  }
  func.func @transform_6(%arg0: i32) -> (i32, i32) {
    %c0_i32 = arith.constant 0 : i32
    %c0_i32_0 = arith.constant 0 : i32
    %c0_i32_1 = arith.constant 0 : i32
    return %c0_i32, %c0_i32_0 : i32, i32
  }
}

</mosaic_0001>

<llo_original>
// kernel: vanilla_rnn_forward.1
$region0: #{vanilla_rnn_forward.1}
  #allocation0 [shape = 'u32[]', space=smem, size = 0x4, offset = 0x4, fixed_abs, tag = 'smem constant byte address 0x4 - core index']
  #allocation1 [shape = 'u32[144,128]{1,0:T(1,128)}', space=vmem, size = 0x12000, scoped, tag = 'internal scratch']
  #allocation2 [shape = 'f32[64,128]{1,0:T(8,128)}', space=vmem, size = 0x8000, scoped, tag = 'scratch operand']
  %s0 = inlined_call_operand.vmem [shape: f32[64,1], index: 0, kind: input, shape index: {}]
  %s1 = inlined_call_operand.vmem [shape: f32[1,128], index: 1, kind: input, shape index: {}]
  %s2 = inlined_call_operand.vmem [shape: f32[128,128], index: 2, kind: input, shape index: {}]
  %s3 = inlined_call_operand.vmem [shape: f32[1,128], index: 3, kind: input, shape index: {}]
  %s4 = inlined_call_operand.vmem [shape: f32[128,128], index: 4, kind: input, shape index: {}]
  %s5 = inlined_call_operand.vmem [shape: f32[1,128], index: 5, kind: input, shape index: {}]
  %s6 = inlined_call_operand.hbm [shape: f32[8,128], index: 6, kind: output, shape index: {}]
  %s7 = sld [smem:[#allocation0]]
  $region34: #{vanilla_rnn_forward.1} parent=0
    _
  %s9 = ssub.s32 1, %s7
  %s10 = scalar_select 0, %s9, %s7
  $region1: #{vanilla_rnn_forward.1} parent=0
    #allocation3 [shape = 'u8[4096]{0}', space=vmem, size = 0x1000, scoped, tag = 'output window, operand 0, single buffered']
    #allocation4 [shape = 's32[1]{0}', space=sflag, size = 0x4, scoped, tag = 'scoped memory for vanilla_rnn_forward.1']
    %11 = vsyncpa [#allocation4], 0
    // Predicated region
    $region2: #{vanilla_rnn_forward.1} parent=1 // pred_check
      _
    $region3: #{vanilla_rnn_forward.1} parent=1 // pred_check_branch
      %13 = sbr.rel (0) target = $region5
    $region4: #{vanilla_rnn_forward.1} parent=1 // pred_region
      _
    $region5: #{vanilla_rnn_forward.1} parent=1 // pred_fallthru
      _
    // Predicated region
    $region6: #{vanilla_rnn_forward.1} parent=1 // pred_check
      _
    $region7: #{vanilla_rnn_forward.1} parent=1 // pred_check_branch
      %15 = sbr.rel (0) target = $region9
    $region8: #{vanilla_rnn_forward.1} parent=1 // pred_region
      _
    $region9: #{vanilla_rnn_forward.1} parent=1 // pred_fallthru
      _
    // Predicated region
    $region10: #{vanilla_rnn_forward.1} parent=1 // pred_check
      _
    $region11: #{vanilla_rnn_forward.1} parent=1 // pred_check_branch
      %17 = sbr.rel (0) target = $region13
    $region12: #{vanilla_rnn_forward.1} parent=1 // pred_region
      _
    $region13: #{vanilla_rnn_forward.1} parent=1 // pred_fallthru
      _
    // Predicated region
    $region14: #{vanilla_rnn_forward.1} parent=1 // pred_check
      _
    $region15: #{vanilla_rnn_forward.1} parent=1 // pred_check_branch
      %19 = sbr.rel (0) target = $region17
    $region16: #{vanilla_rnn_forward.1} parent=1 // pred_region
      _
    $region17: #{vanilla_rnn_forward.1} parent=1 // pred_fallthru
      _
    // Predicated region
    $region18: #{vanilla_rnn_forward.1} parent=1 // pred_check
      _
    $region19: #{vanilla_rnn_forward.1} parent=1 // pred_check_branch
      %21 = sbr.rel (0) target = $region21
    $region20: #{vanilla_rnn_forward.1} parent=1 // pred_region
      _
    $region21: #{vanilla_rnn_forward.1} parent=1 // pred_fallthru
      _
    // Predicated region
    $region22: #{vanilla_rnn_forward.1} parent=1 // pred_check
      _
    $region23: #{vanilla_rnn_forward.1} parent=1 // pred_check_branch
      %23 = sbr.rel (0) target = $region25
    $region24: #{vanilla_rnn_forward.1} parent=1 // pred_region
      _
    $region25: #{vanilla_rnn_forward.1} parent=1 // pred_fallthru
      _
    %v24 = vld [vmem:[%s0] sm:$0xff]
    %v25 = vld [vmem:[%s0 + $0x8] sm:$0xff]
    %v26 = vld [vmem:[%s0 + $0x10] sm:$0xff]
    %v27 = vld [vmem:[%s0 + $0x18] sm:$0xff]
    %v28 = vld [vmem:[%s0 + $0x20] sm:$0xff]
    %v29 = vld [vmem:[%s0 + $0x28] sm:$0xff]
    %v30 = vld [vmem:[%s0 + $0x30] sm:$0xff]
    %v31 = vld [vmem:[%s0 + $0x38] sm:$0xff]
    %v32 = vld [vmem:[%s1] sm:$0x1]
    %v33 = vld [vmem:[%s3] sm:$0x1]
    %v35 = vlaneseq
    %v36 = vshrl.u32 %v35, 7
    %v37 = vsub.s32 0, %v36
    %v38 = vrot.slane %v33, %v37
    %vm40 = vcmask 7168
    %v42 = vsel %vm40, %v24, 0
    %v45 = vsel %vm40, %v25, 0
    %v48 = vsel %vm40, %v26, 0
    %v51 = vsel %vm40, %v27, 0
    %v54 = vsel %vm40, %v28, 0
    %v57 = vsel %vm40, %v29, 0
    %v60 = vsel %vm40, %v30, 0
    %v63 = vsel %vm40, %v31, 0
    %vm65 = vcmask 1040384
    %v67 = vsel %vm65, %v32, 0
    %69 = vmatprep.subr.mxu0 0.0
    %70 = vmatpush1.msra.mxu0 %v67
    %71 = vmatprep.subr.mxu0 0.0
    %72 = vmatpush1.msra.mxu0 0.0
    %73 = vmatprep.subr.mxu0 0.0
    %74 = vmatpush1.msra.mxu0 0.0
    %75 = vmatprep.subr.mxu0 0.0
    %76 = vmatpush1.msra.mxu0 0.0
    %77 = vmatprep.subr.mxu0 0.0
    %78 = vmatpush1.msra.mxu0 0.0
    %79 = vmatprep.subr.mxu0 0.0
    %80 = vmatpush1.msra.mxu0 0.0
    %81 = vmatprep.subr.mxu0 0.0
    %82 = vmatpush1.msra.mxu0 0.0
    %83 = vmatprep.subr.mxu0 0.0
    %84 = vmatpush1.msra.mxu0 0.0
    %85 = vmatprep.subr.mxu0 0.0
    %86 = vmatpush1.msra.mxu0 0.0
    %87 = vmatprep.subr.mxu0 0.0
    %88 = vmatpush1.msra.mxu0 0.0
    %89 = vmatprep.subr.mxu0 0.0
    %90 = vmatpush1.msra.mxu0 0.0
    %91 = vmatprep.subr.mxu0 0.0
    %92 = vmatpush1.msra.mxu0 0.0
    %93 = vmatprep.subr.mxu0 0.0
    %94 = vmatpush1.msra.mxu0 0.0
    %95 = vmatprep.subr.mxu0 0.0
    %96 = vmatpush1.msra.mxu0 0.0
    %97 = vmatprep.subr.mxu0 0.0
    %98 = vmatpush1.msra.mxu0 0.0
    %99 = vmatprep.subr.mxu0 0.0
    %100 = vmatpush1.msra.mxu0 0.0
    %101 = vmatprep.subr.mxu0 0.0
    %102 = vmatpush1.msra.mxu0 0.0
    %103 = vmatprep.subr.mxu0 0.0
    %104 = vmatpush1.msra.mxu0 0.0
    %105 = vmatprep.subr.mxu0 0.0
    %106 = vmatpush1.msra.mxu0 0.0
    %107 = vmatprep.subr.mxu0 0.0
    %108 = vmatpush1.msra.mxu0 0.0
    %109 = vmatprep.subr.mxu0 0.0
    %110 = vmatpush1.msra.mxu0 0.0
    %111 = vmatprep.subr.mxu0 0.0
    %112 = vmatpush1.msra.mxu0 0.0
    %113 = vmatprep.subr.mxu0 0.0
    %114 = vmatpush1.msra.mxu0 0.0
    %115 = vmatprep.subr.mxu0 0.0
    %116 = vmatpush1.msra.mxu0 0.0
    %117 = vmatprep.subr.mxu0 0.0
    %118 = vmatpush1.msra.mxu0 0.0
    %119 = vmatprep.subr.mxu0 0.0
    %120 = vmatpush1.msra.mxu0 0.0
    %121 = vmatprep.subr.mxu0 0.0
    %122 = vmatpush1.msra.mxu0 0.0
    %123 = vmatprep.subr.mxu0 0.0
    %124 = vmatpush1.msra.mxu0 0.0
    %125 = vmatprep.subr.mxu0 0.0
    %126 = vmatpush1.msra.mxu0 0.0
    %127 = vmatprep.subr.mxu0 0.0
    %128 = vmatpush1.msra.mxu0 0.0
    %129 = vmatprep.subr.mxu0 0.0
    %130 = vmatpush1.msra.mxu0 0.0
    %131 = vmatprep.subr.mxu0 0.0
    %132 = vmatpush1.msra.mxu0 0.0
    %133 = vmatprep.mubr.f32.mxu0 0.0
    %134 = vmatmul.mubr.f32.gmra.mrb[0].mxu0 %v42
    %v135 = vpop.f32.mrb[0].mxu0
    %v136 = vadd.f32 %v38, %v135
    %v137 = vpop.f32.mrb[0].mxu0
    %138 = vmatprep.mubr.f32.mxu0 0.0
    %139 = vmatmul.mubr.f32.gmra.mrb[0].mxu0 %v45
    %v140 = vpop.f32.mrb[0].mxu0
    %v141 = vadd.f32 %v38, %v140
    %v142 = vpop.f32.mrb[0].mxu0
    %143 = vmatprep.mubr.f32.mxu0 0.0
    %144 = vmatmul.mubr.f32.gmra.mrb[0].mxu0 %v48
    %v145 = vpop.f32.mrb[0].mxu0
    %v146 = vadd.f32 %v38, %v145
    %v147 = vpop.f32.mrb[0].mxu0
    %148 = vmatprep.mubr.f32.mxu0 0.0
    %149 = vmatmul.mubr.f32.gmra.mrb[0].mxu0 %v51
    %v150 = vpop.f32.mrb[0].mxu0
    %v151 = vadd.f32 %v38, %v150
    %v152 = vpop.f32.mrb[0].mxu0
    %153 = vmatprep.mubr.f32.mxu0 0.0
    %154 = vmatmul.mubr.f32.gmra.mrb[0].mxu0 %v54
    %v155 = vpop.f32.mrb[0].mxu0
    %v156 = vadd.f32 %v38, %v155
    %v157 = vpop.f32.mrb[0].mxu0
    %158 = vmatprep.mubr.f32.mxu0 0.0
    %159 = vmatmul.mubr.f32.gmra.mrb[0].mxu0 %v57
    %v160 = vpop.f32.mrb[0].mxu0
    %v161 = vadd.f32 %v38, %v160
    %v162 = vpop.f32.mrb[0].mxu0
    %163 = vmatprep.mubr.f32.mxu0 0.0
    %164 = vmatmul.mubr.f32.gmra.mrb[0].mxu0 %v60
    %v165 = vpop.f32.mrb[0].mxu0
    %v166 = vadd.f32 %v38, %v165
    %v167 = vpop.f32.mrb[0].mxu0
    %168 = vmatprep.mubr.f32.mxu0 0.0
    %169 = vmatmul.mubr.f32.gmra.mrb[0].mxu0 %v63
    %v170 = vpop.f32.mrb[0].mxu0
    %v171 = vadd.f32 %v38, %v170
    %v172 = vpop.f32.mrb[0].mxu0
    %173 = vdwg.mxu0
    %174 = vst [vmem:[#allocation2] sm:$0xff] %v136
    %175 = vst [vmem:[#allocation2 + $0x8] sm:$0xff] %v141
    %176 = vst [vmem:[#allocation2 + $0x10] sm:$0xff] %v146
    %177 = vst [vmem:[#allocation2 + $0x18] sm:$0xff] %v151
    %178 = vst [vmem:[#allocation2 + $0x20] sm:$0xff] %v156
    %179 = vst [vmem:[#allocation2 + $0x28] sm:$0xff] %v161
    %180 = vst [vmem:[#allocation2 + $0x30] sm:$0xff] %v166
    %181 = vst [vmem:[#allocation2 + $0x38] sm:$0xff] %v171
    %v182 = vld [vmem:[%s2] sm:$0xff]
    %v183 = vld [vmem:[%s2 + $0x8] sm:$0xff]
    %v184 = vld [vmem:[%s2 + $0x10] sm:$0xff]
    %v185 = vld [vmem:[%s2 + $0x18] sm:$0xff]
    %v186 = vld [vmem:[%s2 + $0x20] sm:$0xff]
    %v187 = vld [vmem:[%s2 + $0x28] sm:$0xff]
    %v188 = vld [vmem:[%s2 + $0x30] sm:$0xff]
    %v189 = vld [vmem:[%s2 + $0x38] sm:$0xff]
    %v190 = vld [vmem:[%s2 + $0x40] sm:$0xff]
    %v191 = vld [vmem:[%s2 + $0x48] sm:$0xff]
    %v192 = vld [vmem:[%s2 + $0x50] sm:$0xff]
    %v193 = vld [vmem:[%s2 + $0x58] sm:$0xff]
    %v194 = vld [vmem:[%s2 + $0x60] sm:$0xff]
    %v195 = vld [vmem:[%s2 + $0x68] sm:$0xff]
    %v196 = vld [vmem:[%s2 + $0x70] sm:$0xff]
    %v197 = vld [vmem:[%s2 + $0x78] sm:$0xff]
    %v198 = vld [vmem:[#allocation2] sm:$0xff]
    %199 = vmatprep.subr.mxu0 0.0
    %200 = vmatpush1.msra.mxu0 %v182
    %201 = vmatprep.subr.mxu0 0.0
    %202 = vmatpush1.msra.mxu0 %v183
    %203 = vmatprep.subr.mxu0 0.0
    %204 = vmatpush1.msra.mxu0 %v184
    %205 = vmatprep.subr.mxu0 0.0
    %206 = vmatpush1.msra.mxu0 %v185
    %207 = vmatprep.subr.mxu0 0.0
    %208 = vmatpush1.msra.mxu0 %v186
    %209 = vmatprep.subr.mxu0 0.0
    %210 = vmatpush1.msra.mxu0 %v187
    %211 = vmatprep.subr.mxu0 0.0
    %212 = vmatpush1.msra.mxu0 %v188
    %213 = vmatprep.subr.mxu0 0.0
    %214 = vmatpush1.msra.mxu0 %v189
    %215 = vmatprep.subr.mxu0 0.0
    %216 = vmatpush1.msra.mxu0 %v190
    %217 = vmatprep.subr.mxu0 0.0
    %218 = vmatpush1.msra.mxu0 %v191
    %219 = vmatprep.subr.mxu0 0.0
    %220 = vmatpush1.msra.mxu0 %v192
    %221 = vmatprep.subr.mxu0 0.0
    %222 = vmatpush1.msra.mxu0 %v193
    %223 = vmatprep.subr.mxu0 0.0
    %224 = vmatpush1.msra.mxu0 %v194
    %225 = vmatprep.subr.mxu0 0.0
    %226 = vmatpush1.msra.mxu0 %v195
    %227 = vmatprep.subr.mxu0 0.0
    %228 = vmatpush1.msra.mxu0 %v196
    %229 = vmatprep.subr.mxu0 0.0
    %230 = vmatpush1.msra.mxu0 %v197
    %231 = vmatprep.subr.mxu0 0.0
    %232 = vmatpush1.msra.mxu0 0.0
    %233 = vmatprep.subr.mxu0 0.0
    %234 = vmatpush1.msra.mxu0 0.0
    %235 = vmatprep.subr.mxu0 0.0
    %236 = vmatpush1.msra.mxu0 0.0
    %237 = vmatprep.subr.mxu0 0.0
    %238 = vmatpush1.msra.mxu0 0.0
    %239 = vmatprep.subr.mxu0 0.0
    %240 = vmatpush1.msra.mxu0 0.0
    %241 = vmatprep.subr.mxu0 0.0
    %242 = vmatpush1.msra.mxu0 0.0
    %243 = vmatprep.subr.mxu0 0.0
    %244 = vmatpush1.msra.mxu0 0.0
    %245 = vmatprep.subr.mxu0 0.0
    %246 = vmatpush1.msra.mxu0 0.0
    %247 = vmatprep.subr.mxu0 0.0
    %248 = vmatpush1.msra.mxu0 0.0
    %249 = vmatprep.subr.mxu0 0.0
    %250 = vmatpush1.msra.mxu0 0.0
    %251 = vmatprep.subr.mxu0 0.0
    %252 = vmatpush1.msra.mxu0 0.0
    %253 = vmatprep.subr.mxu0 0.0
    %254 = vmatpush1.msra.mxu0 0.0
    %255 = vmatprep.subr.mxu0 0.0
    %256 = vmatpush1.msra.mxu0 0.0
    %257 = vmatprep.subr.mxu0 0.0
    %258 = vmatpush1.msra.mxu0 0.0
    %259 = vmatprep.subr.mxu0 0.0
    %260 = vmatpush1.msra.mxu0 0.0
    %261 = vmatprep.subr.mxu0 0.0
    %262 = vmatpush1.msra.mxu0 0.0
    %263 = vmatprep.mubr.f32.mxu0 0.0
    %264 = vmatmul.mubr.f32.gmra.mrb[0].mxu0 0.0
    %v265 = vpop.f32.mrb[0].mxu0
    %v266 = vadd.f32 %v198, %v265
    %v267 = vpop.f32.mrb[0].mxu0
    %268 = vdwg.mxu0
    %v269 = vtanh.pop %v266
    %s270 = scalar_lea.vmem [#allocation2], 8
    %v271 = vld [vmem:[%s270] sm:$0xff]
    %272 = vmatprep.subr.mxu0 0.0
    %273 = vmatpush1.msra.mxu0 %v182
    %274 = vmatprep.subr.mxu0 0.0
    %275 = vmatpush1.msra.mxu0 %v183
    %276 = vmatprep.subr.mxu0 0.0
    %277 = vmatpush1.msra.mxu0 %v184
    %278 = vmatprep.subr.mxu0 0.0
    %279 = vmatpush1.msra.mxu0 %v185
    %280 = vmatprep.subr.mxu0 0.0
    %281 = vmatpush1.msra.mxu0 %v186
    %282 = vmatprep.subr.mxu0 0.0
    %283 = vmatpush1.msra.mxu0 %v187
    %284 = vmatprep.subr.mxu0 0.0
    %285 = vmatpush1.msra.mxu0 %v188
    %286 = vmatprep.subr.mxu0 0.0
    %287 = vmatpush1.msra.mxu0 %v189
    %288 = vmatprep.subr.mxu0 0.0
    %289 = vmatpush1.msra.mxu0 %v190
    %290 = vmatprep.subr.mxu0 0.0
    %291 = vmatpush1.msra.mxu0 %v191
    %292 = vmatprep.subr.mxu0 0.0
    %293 = vmatpush1.msra.mxu0 %v192
    %294 = vmatprep.subr.mxu0 0.0
    %295 = vmatpush1.msra.mxu0 %v193
    %296 = vmatprep.subr.mxu0 0.0
    %297 = vmatpush1.msra.mxu0 %v194
    %298 = vmatprep.subr.mxu0 0.0
    %299 = vmatpush1.msra.mxu0 %v195
    %300 = vmatprep.subr.mxu0 0.0
    %301 = vmatpush1.msra.mxu0 %v196
    %302 = vmatprep.subr.mxu0 0.0
    %303 = vmatpush1.msra.mxu0 %v197
    %304 = vmatprep.subr.mxu0 0.0
    %305 = vmatpush1.msra.mxu0 0.0
    %306 = vmatprep.subr.mxu0 0.0
    %307 = vmatpush1.msra.mxu0 0.0
    %308 = vmatprep.subr.mxu0 0.0
    %309 = vmatpush1.msra.mxu0 0.0
    %310 = vmatprep.subr.mxu0 0.0
    %311 = vmatpush1.msra.mxu0 0.0
    %312 = vmatprep.subr.mxu0 0.0
    %313 = vmatpush1.msra.mxu0 0.0
    %314 = vmatprep.subr.mxu0 0.0
    %315 = vmatpush1.msra.mxu0 0.0
    %316 = vmatprep.subr.mxu0 0.0
    %317 = vmatpush1.msra.mxu0 0.0
    %318 = vmatprep.subr.mxu0 0.0
    %319 = vmatpush1.msra.mxu0 0.0
    %320 = vmatprep.subr.mxu0 0.0
    %321 = vmatpush1.msra.mxu0 0.0
    %322 = vmatprep.subr.mxu0 0.0
    %323 = vmatpush1.msra.mxu0 0.0
    %324 = vmatprep.subr.mxu0 0.0
    %325 = vmatpush1.msra.mxu0 0.0
    %326 = vmatprep.subr.mxu0 0.0
    %327 = vmatpush1.msra.mxu0 0.0
    %328 = vmatprep.subr.mxu0 0.0
    %329 = vmatpush1.msra.mxu0 0.0
    %330 = vmatprep.subr.mxu0 0.0
    %331 = vmatpush1.msra.mxu0 0.0
    %332 = vmatprep.subr.mxu0 0.0
    %333 = vmatpush1.msra.mxu0 0.0
    %334 = vmatprep.subr.mxu0 0.0
    %335 = vmatpush1.msra.mxu0 0.0
    %336 = vmatprep.mubr.f32.mxu0 0.0
    %337 = vmatmul.mubr.f32.gmra.mrb[0].mxu0 %v269
    %v338 = vpop.f32.mrb[0].mxu0
    %v339 = vadd.f32 %v271, %v338
    %v340 = vpop.f32.mrb[0].mxu0
    %341 = vdwg.mxu0
    %v342 = vtanh.pop %v339
    %s343 = scalar_lea.vmem [#allocation2], 16
    %v344 = vld [vmem:[%s343] sm:$0xff]
    %345 = vmatprep.subr.mxu0 0.0
    %346 = vmatpush1.msra.mxu0 %v182
    %347 = vmatprep.subr.mxu0 0.0
    %348 = vmatpush1.msra.mxu0 %v183
    %349 = vmatprep.subr.mxu0 0.0
    %350 = vmatpush1.msra.mxu0 %v184
    %351 = vmatprep.subr.mxu0 0.0
    %352 = vmatpush1.msra.mxu0 %v185
    %353 = vmatprep.subr.mxu0 0.0
    %354 = vmatpush1.msra.mxu0 %v186
    %355 = vmatprep.subr.mxu0 0.0
    %356 = vmatpush1.msra.mxu0 %v187
    %357 = vmatprep.subr.mxu0 0.0
    %358 = vmatpush1.msra.mxu0 %v188
    %359 = vmatprep.subr.mxu0 0.0
    %360 = vmatpush1.msra.mxu0 %v189
    %361 = vmatprep.subr.mxu0 0.0
    %362 = vmatpush1.msra.mxu0 %v190
    %363 = vmatprep.subr.mxu0 0.0
    %364 = vmatpush1.msra.mxu0 %v191
    %365 = vmatprep.subr.mxu0 0.0
    %366 = vmatpush1.msra.mxu0 %v192
    %367 = vmatprep.subr.mxu0 0.0
    %368 = vmatpush1.msra.mxu0 %v193
    %369 = vmatprep.subr.mxu0 0.0
    %370 = vmatpush1.msra.mxu0 %v194
    %371 = vmatprep.subr.mxu0 0.0
    %372 = vmatpush1.msra.mxu0 %v195
    %373 = vmatprep.subr.mxu0 0.0
    %374 = vmatpush1.msra.mxu0 %v196
    %375 = vmatprep.subr.mxu0 0.0
    %376 = vmatpush1.msra.mxu0 %v197
    %377 = vmatprep.subr.mxu0 0.0
    %378 = vmatpush1.msra.mxu0 0.0
    %379 = vmatprep.subr.mxu0 0.0
    %380 = vmatpush1.msra.mxu0 0.0
    %381 = vmatprep.subr.mxu0 0.0
    %382 = vmatpush1.msra.mxu0 0.0
    %383 = vmatprep.subr.mxu0 0.0
    %384 = vmatpush1.msra.mxu0 0.0
    %385 = vmatprep.subr.mxu0 0.0
    %386 = vmatpush1.msra.mxu0 0.0
    %387 = vmatprep.subr.mxu0 0.0
    %388 = vmatpush1.msra.mxu0 0.0
    %389 = vmatprep.subr.mxu0 0.0
    %390 = vmatpush1.msra.mxu0 0.0
    %391 = vmatprep.subr.mxu0 0.0
    %392 = vmatpush1.msra.mxu0 0.0
    %393 = vmatprep.subr.mxu0 0.0
    %394 = vmatpush1.msra.mxu0 0.0
    %395 = vmatprep.subr.mxu0 0.0
    %396 = vmatpush1.msra.mxu0 0.0
    %397 = vmatprep.subr.mxu0 0.0
    %398 = vmatpush1.msra.mxu0 0.0
    %399 = vmatprep.subr.mxu0 0.0
    %400 = vmatpush1.msra.mxu0 0.0
    %401 = vmatprep.subr.mxu0 0.0
    %402 = vmatpush1.msra.mxu0 0.0
    %403 = vmatprep.subr.mxu0 0.0
    %404 = vmatpush1.msra.mxu0 0.0
    %405 = vmatprep.subr.mxu0 0.0
    %406 = vmatpush1.msra.mxu0 0.0
    %407 = vmatprep.subr.mxu0 0.0
    %408 = vmatpush1.msra.mxu0 0.0
    %409 = vmatprep.mubr.f32.mxu0 0.0
    %410 = vmatmul.mubr.f32.gmra.mrb[0].mxu0 %v342
    %v411 = vpop.f32.mrb[0].mxu0
    %v412 = vadd.f32 %v344, %v411
    %v413 = vpop.f32.mrb[0].mxu0
    %414 = vdwg.mxu0
    %v415 = vtanh.pop %v412
    %s416 = scalar_lea.vmem [#allocation2], 24
    %v417 = vld [vmem:[%s416] sm:$0xff]
    %418 = vmatprep.subr.mxu0 0.0
    %419 = vmatpush1.msra.mxu0 %v182
    %420 = vmatprep.subr.mxu0 0.0
    %421 = vmatpush1.msra.mxu0 %v183
    %422 = vmatprep.subr.mxu0 0.0
    %423 = vmatpush1.msra.mxu0 %v184
    %424 = vmatprep.subr.mxu0 0.0
    %425 = vmatpush1.msra.mxu0 %v185
    %426 = vmatprep.subr.mxu0 0.0
    %427 = vmatpush1.msra.mxu0 %v186
    %428 = vmatprep.subr.mxu0 0.0
    %429 = vmatpush1.msra.mxu0 %v187
    %430 = vmatprep.subr.mxu0 0.0
    %431 = vmatpush1.msra.mxu0 %v188
    %432 = vmatprep.subr.mxu0 0.0
    %433 = vmatpush1.msra.mxu0 %v189
    %434 = vmatprep.subr.mxu0 0.0
    %435 = vmatpush1.msra.mxu0 %v190
    %436 = vmatprep.subr.mxu0 0.0
    %437 = vmatpush1.msra.mxu0 %v191
    %438 = vmatprep.subr.mxu0 0.0
    %439 = vmatpush1.msra.mxu0 %v192
    %440 = vmatprep.subr.mxu0 0.0
    %441 = vmatpush1.msra.mxu0 %v193
    %442 = vmatprep.subr.mxu0 0.0
    %443 = vmatpush1.msra.mxu0 %v194
    %444 = vmatprep.subr.mxu0 0.0
    %445 = vmatpush1.msra.mxu0 %v195
    %446 = vmatprep.subr.mxu0 0.0
    %447 = vmatpush1.msra.mxu0 %v196
    %448 = vmatprep.subr.mxu0 0.0
    %449 = vmatpush1.msra.mxu0 %v197
    %450 = vmatprep.subr.mxu0 0.0
    %451 = vmatpush1.msra.mxu0 0.0
    %452 = vmatprep.subr.mxu0 0.0
    %453 = vmatpush1.msra.mxu0 0.0
    %454 = vmatprep.subr.mxu0 0.0
    %455 = vmatpush1.msra.mxu0 0.0
    %456 = vmatprep.subr.mxu0 0.0
    %457 = vmatpush1.msra.mxu0 0.0
    %458 = vmatprep.subr.mxu0 0.0
    %459 = vmatpush1.msra.mxu0 0.0
    %460 = vmatprep.subr.mxu0 0.0
    %461 = vmatpush1.msra.mxu0 0.0
    %462 = vmatprep.subr.mxu0 0.0
    %463 = vmatpush1.msra.mxu0 0.0
    %464 = vmatprep.subr.mxu0 0.0
    %465 = vmatpush1.msra.mxu0 0.0
    %466 = vmatprep.subr.mxu0 0.0
    %467 = vmatpush1.msra.mxu0 0.0
    %468 = vmatprep.subr.mxu0 0.0
    %469 = vmatpush1.msra.mxu0 0.0
    %470 = vmatprep.subr.mxu0 0.0
    %471 = vmatpush1.msra.mxu0 0.0
    %472 = vmatprep.subr.mxu0 0.0
    %473 = vmatpush1.msra.mxu0 0.0
    %474 = vmatprep.subr.mxu0 0.0
    %475 = vmatpush1.msra.mxu0 0.0
    %476 = vmatprep.subr.mxu0 0.0
    %477 = vmatpush1.msra.mxu0 0.0
    %478 = vmatprep.subr.mxu0 0.0
    %479 = vmatpush1.msra.mxu0 0.0
    %480 = vmatprep.subr.mxu0 0.0
    %481 = vmatpush1.msra.mxu0 0.0
    %482 = vmatprep.mubr.f32.mxu0 0.0
    %483 = vmatmul.mubr.f32.gmra.mrb[0].mxu0 %v415
    %v484 = vpop.f32.mrb[0].mxu0
    %v485 = vadd.f32 %v417, %v484
    %v486 = vpop.f32.mrb[0].mxu0
    %487 = vdwg.mxu0
    %v488 = vtanh.pop %v485
    %s489 = scalar_lea.vmem [#allocation2], 32
    %v490 = vld [vmem:[%s489] sm:$0xff]
    %491 = vmatprep.subr.mxu0 0.0
    %492 = vmatpush1.msra.mxu0 %v182
    %493 = vmatprep.subr.mxu0 0.0
    %494 = vmatpush1.msra.mxu0 %v183
    %495 = vmatprep.subr.mxu0 0.0
    %496 = vmatpush1.msra.mxu0 %v184
    %497 = vmatprep.subr.mxu0 0.0
    %498 = vmatpush1.msra.mxu0 %v185
    %499 = vmatprep.subr.mxu0 0.0
    %500 = vmatpush1.msra.mxu0 %v186
    %501 = vmatprep.subr.mxu0 0.0
    %502 = vmatpush1.msra.mxu0 %v187
    %503 = vmatprep.subr.mxu0 0.0
    %504 = vmatpush1.msra.mxu0 %v188
    %505 = vmatprep.subr.mxu0 0.0
    %506 = vmatpush1.msra.mxu0 %v189
    %507 = vmatprep.subr.mxu0 0.0
    %508 = vmatpush1.msra.mxu0 %v190
    %509 = vmatprep.subr.mxu0 0.0
    %510 = vmatpush1.msra.mxu0 %v191
    %511 = vmatprep.subr.mxu0 0.0
    %512 = vmatpush1.msra.mxu0 %v192
    %513 = vmatprep.subr.mxu0 0.0
    %514 = vmatpush1.msra.mxu0 %v193
    %515 = vmatprep.subr.mxu0 0.0
    %516 = vmatpush1.msra.mxu0 %v194
    %517 = vmatprep.subr.mxu0 0.0
    %518 = vmatpush1.msra.mxu0 %v195
    %519 = vmatprep.subr.mxu0 0.0
    %520 = vmatpush1.msra.mxu0 %v196
    %521 = vmatprep.subr.mxu0 0.0
    %522 = vmatpush1.msra.mxu0 %v197
    %523 = vmatprep.subr.mxu0 0.0
    %524 = vmatpush1.msra.mxu0 0.0
    %525 = vmatprep.subr.mxu0 0.0
    %526 = vmatpush1.msra.mxu0 0.0
    %527 = vmatprep.subr.mxu0 0.0
    %528 = vmatpush1.msra.mxu0 0.0
    %529 = vmatprep.subr.mxu0 0.0
    %530 = vmatpush1.msra.mxu0 0.0
    %531 = vmatprep.subr.mxu0 0.0
    %532 = vmatpush1.msra.mxu0 0.0
    %533 = vmatprep.subr.mxu0 0.0
    %534 = vmatpush1.msra.mxu0 0.0
    %535 = vmatprep.subr.mxu0 0.0
    %536 = vmatpush1.msra.mxu0 0.0
    %537 = vmatprep.subr.mxu0 0.0
    %538 = vmatpush1.msra.mxu0 0.0
    %539 = vmatprep.subr.mxu0 0.0
    %540 = vmatpush1.msra.mxu0 0.0
    %541 = vmatprep.subr.mxu0 0.0
    %542 = vmatpush1.msra.mxu0 0.0
    %543 = vmatprep.subr.mxu0 0.0
    %544 = vmatpush1.msra.mxu0 0.0
    %545 = vmatprep.subr.mxu0 0.0
    %546 = vmatpush1.msra.mxu0 0.0
    %547 = vmatprep.subr.mxu0 0.0
    %548 = vmatpush1.msra.mxu0 0.0
    %549 = vmatprep.subr.mxu0 0.0
    %550 = vmatpush1.msra.mxu0 0.0
    %551 = vmatprep.subr.mxu0 0.0
    %552 = vmatpush1.msra.mxu0 0.0
    %553 = vmatprep.subr.mxu0 0.0
    %554 = vmatpush1.msra.mxu0 0.0
    %555 = vmatprep.mubr.f32.mxu0 0.0
    %556 = vmatmul.mubr.f32.gmra.mrb[0].mxu0 %v488
    %v557 = vpop.f32.mrb[0].mxu0
    %v558 = vadd.f32 %v490, %v557
    %v559 = vpop.f32.mrb[0].mxu0
    %560 = vdwg.mxu0
    %v561 = vtanh.pop %v558
    %s562 = scalar_lea.vmem [#allocation2], 40
    %v563 = vld [vmem:[%s562] sm:$0xff]
    %564 = vmatprep.subr.mxu0 0.0
    %565 = vmatpush1.msra.mxu0 %v182
    %566 = vmatprep.subr.mxu0 0.0
    %567 = vmatpush1.msra.mxu0 %v183
    %568 = vmatprep.subr.mxu0 0.0
    %569 = vmatpush1.msra.mxu0 %v184
    %570 = vmatprep.subr.mxu0 0.0
    %571 = vmatpush1.msra.mxu0 %v185
    %572 = vmatprep.subr.mxu0 0.0
    %573 = vmatpush1.msra.mxu0 %v186
    %574 = vmatprep.subr.mxu0 0.0
    %575 = vmatpush1.msra.mxu0 %v187
    %576 = vmatprep.subr.mxu0 0.0
    %577 = vmatpush1.msra.mxu0 %v188
    %578 = vmatprep.subr.mxu0 0.0
    %579 = vmatpush1.msra.mxu0 %v189
    %580 = vmatprep.subr.mxu0 0.0
    %581 = vmatpush1.msra.mxu0 %v190
    %582 = vmatprep.subr.mxu0 0.0
    %583 = vmatpush1.msra.mxu0 %v191
    %584 = vmatprep.subr.mxu0 0.0
    %585 = vmatpush1.msra.mxu0 %v192
    %586 = vmatprep.subr.mxu0 0.0
    %587 = vmatpush1.msra.mxu0 %v193
    %588 = vmatprep.subr.mxu0 0.0
    %589 = vmatpush1.msra.mxu0 %v194
    %590 = vmatprep.subr.mxu0 0.0
    %591 = vmatpush1.msra.mxu0 %v195
    %592 = vmatprep.subr.mxu0 0.0
    %593 = vmatpush1.msra.mxu0 %v196
    %594 = vmatprep.subr.mxu0 0.0
    %595 = vmatpush1.msra.mxu0 %v197
    %596 = vmatprep.subr.mxu0 0.0
    %597 = vmatpush1.msra.mxu0 0.0
    %598 = vmatprep.subr.mxu0 0.0
    %599 = vmatpush1.msra.mxu0 0.0
    %600 = vmatprep.subr.mxu0 0.0
    %601 = vmatpush1.msra.mxu0 0.0
    %602 = vmatprep.subr.mxu0 0.0
    %603 = vmatpush1.msra.mxu0 0.0
    %604 = vmatprep.subr.mxu0 0.0
    %605 = vmatpush1.msra.mxu0 0.0
    %606 = vmatprep.subr.mxu0 0.0
    %607 = vmatpush1.msra.mxu0 0.0
    %608 = vmatprep.subr.mxu0 0.0
    %609 = vmatpush1.msra.mxu0 0.0
    %610 = vmatprep.subr.mxu0 0.0
    %611 = vmatpush1.msra.mxu0 0.0
    %612 = vmatprep.subr.mxu0 0.0
    %613 = vmatpush1.msra.mxu0 0.0
    %614 = vmatprep.subr.mxu0 0.0
    %615 = vmatpush1.msra.mxu0 0.0
    %616 = vmatprep.subr.mxu0 0.0
    %617 = vmatpush1.msra.mxu0 0.0
    %618 = vmatprep.subr.mxu0 0.0
    %619 = vmatpush1.msra.mxu0 0.0
    %620 = vmatprep.subr.mxu0 0.0
    %621 = vmatpush1.msra.mxu0 0.0
    %622 = vmatprep.subr.mxu0 0.0
    %623 = vmatpush1.msra.mxu0 0.0
    %624 = vmatprep.subr.mxu0 0.0
    %625 = vmatpush1.msra.mxu0 0.0
    %626 = vmatprep.subr.mxu0 0.0
    %627 = vmatpush1.msra.mxu0 0.0
    %628 = vmatprep.mubr.f32.mxu0 0.0
    %629 = vmatmul.mubr.f32.gmra.mrb[0].mxu0 %v561
    %v630 = vpop.f32.mrb[0].mxu0
    %v631 = vadd.f32 %v563, %v630
    %v632 = vpop.f32.mrb[0].mxu0
    %633 = vdwg.mxu0
    %v634 = vtanh.pop %v631
    %s635 = scalar_lea.vmem [#allocation2], 48
    %v636 = vld [vmem:[%s635] sm:$0xff]
    %637 = vmatprep.subr.mxu0 0.0
    %638 = vmatpush1.msra.mxu0 %v182
    %639 = vmatprep.subr.mxu0 0.0
    %640 = vmatpush1.msra.mxu0 %v183
    %641 = vmatprep.subr.mxu0 0.0
    %642 = vmatpush1.msra.mxu0 %v184
    %643 = vmatprep.subr.mxu0 0.0
    %644 = vmatpush1.msra.mxu0 %v185
    %645 = vmatprep.subr.mxu0 0.0
    %646 = vmatpush1.msra.mxu0 %v186
    %647 = vmatprep.subr.mxu0 0.0
    %648 = vmatpush1.msra.mxu0 %v187
    %649 = vmatprep.subr.mxu0 0.0
    %650 = vmatpush1.msra.mxu0 %v188
    %651 = vmatprep.subr.mxu0 0.0
    %652 = vmatpush1.msra.mxu0 %v189
    %653 = vmatprep.subr.mxu0 0.0
    %654 = vmatpush1.msra.mxu0 %v190
    %655 = vmatprep.subr.mxu0 0.0
    %656 = vmatpush1.msra.mxu0 %v191
    %657 = vmatprep.subr.mxu0 0.0
    %658 = vmatpush1.msra.mxu0 %v192
    %659 = vmatprep.subr.mxu0 0.0
    %660 = vmatpush1.msra.mxu0 %v193
    %661 = vmatprep.subr.mxu0 0.0
    %662 = vmatpush1.msra.mxu0 %v194
    %663 = vmatprep.subr.mxu0 0.0
    %664 = vmatpush1.msra.mxu0 %v195
    %665 = vmatprep.subr.mxu0 0.0
    %666 = vmatpush1.msra.mxu0 %v196
    %667 = vmatprep.subr.mxu0 0.0
    %668 = vmatpush1.msra.mxu0 %v197
    %669 = vmatprep.subr.mxu0 0.0
    %670 = vmatpush1.msra.mxu0 0.0
    %671 = vmatprep.subr.mxu0 0.0
    %672 = vmatpush1.msra.mxu0 0.0
    %673 = vmatprep.subr.mxu0 0.0
    %674 = vmatpush1.msra.mxu0 0.0
    %675 = vmatprep.subr.mxu0 0.0
    %676 = vmatpush1.msra.mxu0 0.0
    %677 = vmatprep.subr.mxu0 0.0
    %678 = vmatpush1.msra.mxu0 0.0
    %679 = vmatprep.subr.mxu0 0.0
    %680 = vmatpush1.msra.mxu0 0.0
    %681 = vmatprep.subr.mxu0 0.0
    %682 = vmatpush1.msra.mxu0 0.0
    %683 = vmatprep.subr.mxu0 0.0
    %684 = vmatpush1.msra.mxu0 0.0
    %685 = vmatprep.subr.mxu0 0.0
    %686 = vmatpush1.msra.mxu0 0.0
    %687 = vmatprep.subr.mxu0 0.0
    %688 = vmatpush1.msra.mxu0 0.0
    %689 = vmatprep.subr.mxu0 0.0
    %690 = vmatpush1.msra.mxu0 0.0
    %691 = vmatprep.subr.mxu0 0.0
    %692 = vmatpush1.msra.mxu0 0.0
    %693 = vmatprep.subr.mxu0 0.0
    %694 = vmatpush1.msra.mxu0 0.0
    %695 = vmatprep.subr.mxu0 0.0
    %696 = vmatpush1.msra.mxu0 0.0
    %697 = vmatprep.subr.mxu0 0.0
    %698 = vmatpush1.msra.mxu0 0.0
    %699 = vmatprep.subr.mxu0 0.0
    %700 = vmatpush1.msra.mxu0 0.0
    %701 = vmatprep.mubr.f32.mxu0 0.0
    %702 = vmatmul.mubr.f32.gmra.mrb[0].mxu0 %v634
    %v703 = vpop.f32.mrb[0].mxu0
    %v704 = vadd.f32 %v636, %v703
    %v705 = vpop.f32.mrb[0].mxu0
    %706 = vdwg.mxu0
    %v707 = vtanh.pop %v704
    %s708 = scalar_lea.vmem [#allocation2], 56
    %v709 = vld [vmem:[%s708] sm:$0xff]
    %710 = vmatprep.subr.mxu0 0.0
    %711 = vmatpush1.msra.mxu0 %v182
    %712 = vmatprep.subr.mxu0 0.0
    %713 = vmatpush1.msra.mxu0 %v183
    %714 = vmatprep.subr.mxu0 0.0
    %715 = vmatpush1.msra.mxu0 %v184
    %716 = vmatprep.subr.mxu0 0.0
    %717 = vmatpush1.msra.mxu0 %v185
    %718 = vmatprep.subr.mxu0 0.0
    %719 = vmatpush1.msra.mxu0 %v186
    %720 = vmatprep.subr.mxu0 0.0
    %721 = vmatpush1.msra.mxu0 %v187
    %722 = vmatprep.subr.mxu0 0.0
    %723 = vmatpush1.msra.mxu0 %v188
    %724 = vmatprep.subr.mxu0 0.0
    %725 = vmatpush1.msra.mxu0 %v189
    %726 = vmatprep.subr.mxu0 0.0
    %727 = vmatpush1.msra.mxu0 %v190
    %728 = vmatprep.subr.mxu0 0.0
    %729 = vmatpush1.msra.mxu0 %v191
    %730 = vmatprep.subr.mxu0 0.0
    %731 = vmatpush1.msra.mxu0 %v192
    %732 = vmatprep.subr.mxu0 0.0
    %733 = vmatpush1.msra.mxu0 %v193
    %734 = vmatprep.subr.mxu0 0.0
    %735 = vmatpush1.msra.mxu0 %v194
    %736 = vmatprep.subr.mxu0 0.0
    %737 = vmatpush1.msra.mxu0 %v195
    %738 = vmatprep.subr.mxu0 0.0
    %739 = vmatpush1.msra.mxu0 %v196
    %740 = vmatprep.subr.mxu0 0.0
    %741 = vmatpush1.msra.mxu0 %v197
    %742 = vmatprep.subr.mxu0 0.0
    %743 = vmatpush1.msra.mxu0 0.0
    %744 = vmatprep.subr.mxu0 0.0
    %745 = vmatpush1.msra.mxu0 0.0
    %746 = vmatprep.subr.mxu0 0.0
    %747 = vmatpush1.msra.mxu0 0.0
    %748 = vmatprep.subr.mxu0 0.0
    %749 = vmatpush1.msra.mxu0 0.0
    %750 = vmatprep.subr.mxu0 0.0
    %751 = vmatpush1.msra.mxu0 0.0
    %752 = vmatprep.subr.mxu0 0.0
    %753 = vmatpush1.msra.mxu0 0.0
    %754 = vmatprep.subr.mxu0 0.0
    %755 = vmatpush1.msra.mxu0 0.0
    %756 = vmatprep.subr.mxu0 0.0
    %757 = vmatpush1.msra.mxu0 0.0
    %758 = vmatprep.subr.mxu0 0.0
    %759 = vmatpush1.msra.mxu0 0.0
    %760 = vmatprep.subr.mxu0 0.0
    %761 = vmatpush1.msra.mxu0 0.0
    %762 = vmatprep.subr.mxu0 0.0
    %763 = vmatpush1.msra.mxu0 0.0
    %764 = vmatprep.subr.mxu0 0.0
    %765 = vmatpush1.msra.mxu0 0.0
    %766 = vmatprep.subr.mxu0 0.0
    %767 = vmatpush1.msra.mxu0 0.0
    %768 = vmatprep.subr.mxu0 0.0
    %769 = vmatpush1.msra.mxu0 0.0
    %770 = vmatprep.subr.mxu0 0.0
    %771 = vmatpush1.msra.mxu0 0.0
    %772 = vmatprep.subr.mxu0 0.0
    %773 = vmatpush1.msra.mxu0 0.0
    %774 = vmatprep.mubr.f32.mxu0 0.0
    %775 = vmatmul.mubr.f32.gmra.mrb[0].mxu0 %v707
    %v776 = vpop.f32.mrb[0].mxu0
    %v777 = vadd.f32 %v709, %v776
    %v778 = vpop.f32.mrb[0].mxu0
    %779 = vdwg.mxu0
    %v780 = vtanh.pop %v777
    %v781 = vld [vmem:[%s4] sm:$0xff]
    %v782 = vld [vmem:[%s4 + $0x8] sm:$0xff]
    %v783 = vld [vmem:[%s4 + $0x10] sm:$0xff]
    %v784 = vld [vmem:[%s4 + $0x18] sm:$0xff]
    %v785 = vld [vmem:[%s4 + $0x20] sm:$0xff]
    %v786 = vld [vmem:[%s4 + $0x28] sm:$0xff]
    %v787 = vld [vmem:[%s4 + $0x30] sm:$0xff]
    %v788 = vld [vmem:[%s4 + $0x38] sm:$0xff]
    %v789 = vld [vmem:[%s4 + $0x40] sm:$0xff]
    %v790 = vld [vmem:[%s4 + $0x48] sm:$0xff]
    %v791 = vld [vmem:[%s4 + $0x50] sm:$0xff]
    %v792 = vld [vmem:[%s4 + $0x58] sm:$0xff]
    %v793 = vld [vmem:[%s4 + $0x60] sm:$0xff]
    %v794 = vld [vmem:[%s4 + $0x68] sm:$0xff]
    %v795 = vld [vmem:[%s4 + $0x70] sm:$0xff]
    %v796 = vld [vmem:[%s4 + $0x78] sm:$0xff]
    %v797 = vld [vmem:[%s5] sm:$0x1]
    %v799 = vlaneseq
    %v800 = vshrl.u32 %v799, 7
    %v801 = vsub.s32 0, %v800
    %v802 = vrot.slane %v797, %v801
    %804 = vmatprep.subr.mxu0 0.0
    %805 = vmatpush1.msra.mxu0 %v781
    %806 = vmatprep.subr.mxu0 0.0
    %807 = vmatpush1.msra.mxu0 %v782
    %808 = vmatprep.subr.mxu0 0.0
    %809 = vmatpush1.msra.mxu0 %v783
    %810 = vmatprep.subr.mxu0 0.0
    %811 = vmatpush1.msra.mxu0 %v784
    %812 = vmatprep.subr.mxu0 0.0
    %813 = vmatpush1.msra.mxu0 %v785
    %814 = vmatprep.subr.mxu0 0.0
    %815 = vmatpush1.msra.mxu0 %v786
    %816 = vmatprep.subr.mxu0 0.0
    %817 = vmatpush1.msra.mxu0 %v787
    %818 = vmatprep.subr.mxu0 0.0
    %819 = vmatpush1.msra.mxu0 %v788
    %820 = vmatprep.subr.mxu0 0.0
    %821 = vmatpush1.msra.mxu0 %v789
    %822 = vmatprep.subr.mxu0 0.0
    %823 = vmatpush1.msra.mxu0 %v790
    %824 = vmatprep.subr.mxu0 0.0
    %825 = vmatpush1.msra.mxu0 %v791
    %826 = vmatprep.subr.mxu0 0.0
    %827 = vmatpush1.msra.mxu0 %v792
    %828 = vmatprep.subr.mxu0 0.0
    %829 = vmatpush1.msra.mxu0 %v793
    %830 = vmatprep.subr.mxu0 0.0
    %831 = vmatpush1.msra.mxu0 %v794
    %832 = vmatprep.subr.mxu0 0.0
    %833 = vmatpush1.msra.mxu0 %v795
    %834 = vmatprep.subr.mxu0 0.0
    %835 = vmatpush1.msra.mxu0 %v796
    %836 = vmatprep.subr.mxu0 0.0
    %837 = vmatpush1.msra.mxu0 0.0
    %838 = vmatprep.subr.mxu0 0.0
    %839 = vmatpush1.msra.mxu0 0.0
    %840 = vmatprep.subr.mxu0 0.0
    %841 = vmatpush1.msra.mxu0 0.0
    %842 = vmatprep.subr.mxu0 0.0
    %843 = vmatpush1.msra.mxu0 0.0
    %844 = vmatprep.subr.mxu0 0.0
    %845 = vmatpush1.msra.mxu0 0.0
    %846 = vmatprep.subr.mxu0 0.0
    %847 = vmatpush1.msra.mxu0 0.0
    %848 = vmatprep.subr.mxu0 0.0
    %849 = vmatpush1.msra.mxu0 0.0
    %850 = vmatprep.subr.mxu0 0.0
    %851 = vmatpush1.msra.mxu0 0.0
    %852 = vmatprep.subr.mxu0 0.0
    %853 = vmatpush1.msra.mxu0 0.0
    %854 = vmatprep.subr.mxu0 0.0
    %855 = vmatpush1.msra.mxu0 0.0
    %856 = vmatprep.subr.mxu0 0.0
    %857 = vmatpush1.msra.mxu0 0.0
    %858 = vmatprep.subr.mxu0 0.0
    %859 = vmatpush1.msra.mxu0 0.0
    %860 = vmatprep.subr.mxu0 0.0
    %861 = vmatpush1.msra.mxu0 0.0
    %862 = vmatprep.subr.mxu0 0.0
    %863 = vmatpush1.msra.mxu0 0.0
    %864 = vmatprep.subr.mxu0 0.0
    %865 = vmatpush1.msra.mxu0 0.0
    %866 = vmatprep.subr.mxu0 0.0
    %867 = vmatpush1.msra.mxu0 0.0
    %868 = vmatprep.mubr.f32.mxu0 0.0
    %869 = vmatmul.mubr.f32.gmra.mrb[0].mxu0 %v780
    %v870 = vpop.f32.mrb[0].mxu0
    %v871 = vadd.f32 %v802, %v870
    %v872 = vpop.f32.mrb[0].mxu0
    %873 = vdwg.mxu0
    %874 = vst [vmem:[#allocation3] sm:$0xff] %v871
    // Predicated region
    $region26: #{vanilla_rnn_forward.1} parent=1 // pred_check
      _
    $region27: #{vanilla_rnn_forward.1} parent=1 // pred_check_branch
      %876 = sbr.rel (0) target = $region29
    $region28: #{vanilla_rnn_forward.1} parent=1 // pred_region
      %s878 = ssub.s32 128, 128
      %879 = vsyncadd [#allocation4], %s878
      %s881 = sshll.u32 [#allocation3], 4
      %s882 = int_to_ptr.vmem [resolvable:$true] %s881
      %884 = dma.vmem_to_hbm [thread:$0]  %s882, 128, %s6, [#allocation4]
    $region29: #{vanilla_rnn_forward.1} parent=1 // pred_fallthru
      _
    // Predicated region
    $region30: #{vanilla_rnn_forward.1} parent=1 // pred_check
      _
    $region31: #{vanilla_rnn_forward.1} parent=1 // pred_check_branch
      %886 = sbr.rel (0) target = $region33
    $region32: #{vanilla_rnn_forward.1} parent=1 // pred_region
      %887 = dma.done [#allocation4], 128
    $region33: #{vanilla_rnn_forward.1} parent=1 // pred_fallthru
      _
    %888 = vsyncpa [#allocation4], 1

</llo_original>
